<compile_context>
chip_gen: v6e
topology: v6e:2x2x1
jax: 0.10.0
libtpu: 0.0.40
codegen_flags: <defaults>
</compile_context>

<pallas_src>
import jax
import jax.numpy as jnp
from jax.experimental import pallas as pl
from jax.experimental.pallas import tpu as pltpu


def _cheby_kernel(xT_ref, adj_ref, w_ref, b_ref, o_ref, u_ref):
    """One grid step (kk, j): produce Chebyshev order kk+1 on column tile j and
    accumulate its output projection.

    Refs (all VMEM):
      xT_ref : (F_in, N)        bf16  x^T (= U_0), constant index -> fetched once
      adj_ref: (N, TN)          bf16  column tile of (2*adj)^T
      w_ref  : (K, F_out, F_in) bf16  stacked W_k^T, constant index -> fetched once
      b_ref  : (F_out, 1)       f32   bias column
      o_ref  : (F_out, N)       f32   out^T, VMEM-resident accumulator (constant
                                      block index); written back to HBM once.
      u_ref  : (2, F_in, N)     f32   rolling U pair, parity slots (order m in
                                      slot m % 2); f32 keeps the three-term
                                      cancellation exact.
    """
    kk = pl.program_id(0)              # round kk produces Chebyshev order kk + 1
    j = pl.program_id(1)
    tn = adj_ref.shape[1]              # static column-tile width
    col = pl.multiple_of(j * tn, tn)   # lane offset of this tile

    adj_tile = adj_ref[...]            # (N, TN) bf16 = (2*adj)^T[:, col:col+TN]

    @pl.when(kk == 0)
    def _orders_0_and_1():
        x_tile = xT_ref[:, pl.ds(col, tn)]                         # (F_in, TN) bf16
        # U_0 tile (only needed as "pprev" for round 1).
        u_ref[0, :, pl.ds(col, tn)] = x_tile.astype(jnp.float32)
        # U_1 = x^T @ adj^T = 0.5 * x^T @ (2*adj)^T  (bf16 MXU, f32 accumulate)
        u1 = 0.5 * jnp.dot(xT_ref[...], adj_tile,
                           preferred_element_type=jnp.float32)     # (F_in, TN) f32
        u_ref[1, :, pl.ds(col, tn)] = u1
        # Output init for this column tile: bias + W_0^T U_0 + W_1^T U_1.
        o_ref[:, pl.ds(col, tn)] = (
            b_ref[...]
            + jnp.dot(w_ref[0], x_tile, preferred_element_type=jnp.float32)
            + jnp.dot(w_ref[1], u1.astype(jnp.bfloat16),
                      preferred_element_type=jnp.float32))

    @pl.when(kk > 0)
    def _recurrence_and_project():
        # U_{kk+1}[:, col] = U_kk @ (2*adj)^T[:, col]  -  U_{kk-1}[:, col]
        slot_prev = kk % 2             # order kk lives in parity slot kk % 2
        slot_new = (kk + 1) % 2        # orders kk-1 and kk+1 share the other slot
        prev = u_ref[slot_prev]                                   # (F_in, N)  f32
        pprev = u_ref[slot_new, :, pl.ds(col, tn)]                # (F_in, TN) f32
        new = (jnp.dot(prev.astype(jnp.bfloat16), adj_tile,
                       preferred_element_type=jnp.float32)
               - pprev)
        u_ref[slot_new, :, pl.ds(col, tn)] = new
        # Accumulate this order's projection into the resident f32 output:
        #   out^T[:, col] += W_{kk+1}^T @ U_{kk+1}[:, col]
        o_ref[:, pl.ds(col, tn)] += jnp.dot(
            w_ref[kk + 1], new.astype(jnp.bfloat16),
            preferred_element_type=jnp.float32)


def _vmem_capacity_bytes():
    """Per-generation physical VMEM capacity with safe fallbacks."""
    try:
        cap = int(pltpu.get_tpu_info().vmem_capacity_bytes)
        if cap > 0:
            return cap
    except Exception:
        pass
    try:
        kind = jax.devices()[0].device_kind.lower()
        if ("v5" in kind) or ("v6" in kind):
            return 128 * 1024 * 1024
    except Exception:
        pass
    return 64 * 1024 * 1024            # v7x-safe lower bound


def cheby_convolution(x, adj, weights, bias=None, *, cheby_order=4, block_n=None):
    """x:(N,F_in) f32, adj:(N,N) f32 dense graph-shift op,
    weights:(K,F_in,F_out) f32, bias:(F_out,) f32 or None -> (N,F_out) f32."""
    assert cheby_order >= 2
    N, f_in = x.shape
    K, wf_in, f_out = weights.shape
    assert K == cheby_order and wf_in == f_in and adj.shape == (N, N)

    # ---- wrapper-side layout plumbing + one-time casts ----
    xT = x.T.astype(jnp.bfloat16)                                   # (F_in, N)
    adj2T = (2.0 * adj).T.astype(jnp.bfloat16)                      # (N, N), 2.0 folded
    wT = jnp.transpose(weights, (0, 2, 1)).astype(jnp.bfloat16)     # (K, F_out, F_in)
    if bias is None:
        b_col = jnp.zeros((f_out, 1), jnp.float32)
    else:
        b_col = bias.reshape(f_out, 1).astype(jnp.float32)

    # ---- per-generation VMEM budget drives the adj-residency / tiling choice ----
    vmem_cap = _vmem_capacity_bytes()
    headroom = 8 * 1024 * 1024
    budget = max(vmem_cap - headroom, 16 * 1024 * 1024)

    # Fixed VMEM cost independent of the adj tile width (assume 2x buffering on
    # all BlockSpec operands; scratch is single-buffered).
    fixed_est = (2 * f_in * N * 2                       # x^T bf16
                 + 2 * K * f_out * max(f_in, 128) * 2   # stacked W^T (lane-padded)
                 + 2 * f_out * 128 * 4                  # bias (lane-padded)
                 + 2 * f_out * N * 4                    # resident out^T f32
                 + 2 * f_in * N * 4)                    # rolling U scratch f32

    if block_n is None:
        if fixed_est + 2 * N * N * 2 <= budget:
            block_n = N                    # adj fully VMEM-resident: streamed once
        else:
            # Tiled path: adj is re-streamed (K-1)x (unavoidable given the
            # recurrence dependence); prefer >=256-wide tiles for the MXU lanes.
            block_n = next((c for c in (512, 256, 128)
                            if N % c == 0 and fixed_est + 2 * N * c * 2 <= budget),
                           next((c for c in (512, 256, 128) if N % c == 0), N))
    assert N % block_n == 0
    num_j = N // block_n
    grid = (cheby_order - 1, num_j)

    est = fixed_est + 2 * N * block_n * 2
    vmem_limit = max(32 * 1024 * 1024,
                     min(int(1.25 * est) + (2 << 20), budget))

    out_t = pl.pallas_call(
        _cheby_kernel,
        out_shape=jax.ShapeDtypeStruct((f_out, N), jnp.float32),
        grid_spec=pltpu.PrefetchScalarGridSpec(
            num_scalar_prefetch=0,
            grid=grid,
            in_specs=[
                pl.BlockSpec((f_in, N), lambda kk, j: (0, 0)),          # x^T (resident)
                pl.BlockSpec((N, block_n), lambda kk, j: (0, j)),        # (2*adj)^T tile
                pl.BlockSpec((K, f_out, f_in), lambda kk, j: (0, 0, 0)), # stacked W^T
                pl.BlockSpec((f_out, 1), lambda kk, j: (0, 0)),          # bias column
            ],
            # Constant block index over the whole grid -> out^T stays resident in
            # VMEM as an f32 accumulator and is written back to HBM exactly once.
            out_specs=pl.BlockSpec((f_out, N), lambda kk, j: (0, 0)),
            scratch_shapes=[pltpu.VMEM((2, f_in, N), jnp.float32)],
        ),
        compiler_params=pltpu.CompilerParams(
            # kk (Chebyshev order) is inherently sequential; j is sequential too
            # because the full-width U_k written during round kk is read by every
            # column tile of round kk+1.
            dimension_semantics=("arbitrary", "arbitrary"),
            vmem_limit_bytes=vmem_limit,
        ),
    )(xT, adj2T, wT, b_col)

    return out_t.T                                                  # (N, F_out)


def cheby_convolution_ref(x, adj, weights, bias=None, *, cheby_order=4):
    """Pure-JAX f32 reference mirroring the PyTorch forward."""
    terms = [x, adj @ x]
    for k in range(2, cheby_order):
        terms.append(2.0 * (adj @ terms[k - 1]) - terms[k - 2])
    out = sum(terms[k] @ weights[k] for k in range(cheby_order))
    if bias is not None:
        out = out + bias.reshape(1, -1)
    return out


if __name__ == "__main__":
    # Small deterministic problem: N=256 graph nodes, 32 -> 64 features, K=4.
    N, F_IN, F_OUT, K = 256, 32, 64, 4

    key = jax.random.PRNGKey(0)
    k_x, k_adj, k_w, k_b = jax.random.split(key, 4)

    x = jax.random.normal(k_x, (N, F_IN), dtype=jnp.float32)
    a = jax.random.normal(k_adj, (N, N), dtype=jnp.float32)
    adj = 0.5 * (a + a.T) / N       # dense stand-in for the sparse graph shift op

    # Parameter init matching the module: normal(mean=0, std=0.05).
    weights = 0.05 * jax.random.normal(k_w, (K, F_IN, F_OUT), dtype=jnp.float32)
    bias = 0.05 * jax.random.normal(k_b, (F_OUT,), dtype=jnp.float32)

    ref = cheby_convolution_ref(x, adj, weights, bias, cheby_order=K)

    # 1) Auto path: adj fits the per-generation VMEM budget -> block_n = N,
    #    adj streamed from HBM once, output written back once.
    out = cheby_convolution(x, adj, weights, bias, cheby_order=K)
    out = jax.block_until_ready(out)
    assert out.shape == (N, F_OUT)
    max_err = float(jnp.max(jnp.abs(out - ref)))
    assert jnp.allclose(out, ref, atol=3e-2, rtol=3e-2), f"max abs err {max_err}"

    # 2) Forced column-tiled path (exercises the adj-streaming pipeline).
    out_t = cheby_convolution(x, adj, weights, bias, cheby_order=K, block_n=128)
    out_t = jax.block_until_ready(out_t)
    max_err_t = float(jnp.max(jnp.abs(out_t - ref)))
    assert jnp.allclose(out_t, ref, atol=3e-2, rtol=3e-2), f"max abs err {max_err_t}"

    print("KERNEL_OK")
</pallas_src>

<mosaic_0001>
module attributes {stable_mosaic.version = 11 : i64} {
  func.func @_cheby_kernel(%arg0: i32, %arg1: i32, %arg2: memref<32x256xbf16, #tpu.memory_space<vmem>>, %arg3: memref<256x256xbf16, #tpu.memory_space<vmem>>, %arg4: memref<4x64x32xbf16, #tpu.memory_space<vmem>>, %arg5: memref<64x1xf32, #tpu.memory_space<vmem>>, %arg6: memref<64x256xf32, #tpu.memory_space<vmem>>, %arg7: memref<2x32x256xf32, #tpu.memory_space<vmem>>) attributes {dimension_semantics = [#tpu.dimension_semantics<arbitrary>, #tpu.dimension_semantics<arbitrary>], iteration_bounds = array<i64: 3, 1>, scalar_prefetch = 0 : i64, scratch_operands = 1 : i64, tpu.core_type = #tpu.core_type<tc>, window_params = [{pipeline_mode = #tpu.pipeline_mode<synchronous>, transform_indices = @transform_0, window_bounds = array<i64: 32, 256>}, {transform_indices = @transform_1, window_bounds = array<i64: 256, 256>}, {pipeline_mode = #tpu.pipeline_mode<synchronous>, transform_indices = @transform_2, window_bounds = array<i64: 4, 64, 32>}, {pipeline_mode = #tpu.pipeline_mode<synchronous>, transform_indices = @transform_3, window_bounds = array<i64: 64, 1>}, {pipeline_mode = #tpu.pipeline_mode<synchronous>, transform_indices = @transform_4, window_bounds = array<i64: 64, 256>}]} {
    %c256_i32 = arith.constant 256 : i32
    %0 = arith.muli %arg1, %c256_i32 : i32
    %1 = tpu.assume_multiple %0, 256 : i32
    %c0 = arith.constant 0 : index
    %c0_0 = arith.constant 0 : index
    %2 = vector.load %arg3[%c0, %c0_0] : memref<256x256xbf16, #tpu.memory_space<vmem>>, vector<256x256xbf16>
    %c0_i32 = arith.constant 0 : i32
    %3 = arith.cmpi eq, %arg0, %c0_i32 : i32
    %4 = arith.extui %3 : i1 to i32
    %c0_i32_1 = arith.constant 0 : i32
    %5 = arith.cmpi ne, %4, %c0_i32_1 : i32
    scf.if %5 {
      %c0_4 = arith.constant 0 : index
      %9 = arith.index_cast %1 : i32 to index
      %10 = vector.load %arg2[%c0_4, %9] : memref<32x256xbf16, #tpu.memory_space<vmem>>, vector<32x256xbf16>
      %11 = arith.extf %10 : vector<32x256xbf16> to vector<32x256xf32>
      %c0_5 = arith.constant 0 : index
      %c0_6 = arith.constant 0 : index
      %12 = arith.index_cast %1 : i32 to index
      %13 = vector.load %arg7[%c0_5, %c0_6, %12] : memref<2x32x256xf32, #tpu.memory_space<vmem>>, vector<1x32x256xf32>
      %14 = vector.shape_cast %13 : vector<1x32x256xf32> to vector<32x256xf32>
      %15 = vector.shape_cast %11 : vector<32x256xf32> to vector<1x32x256xf32>
      tpu.vector_store %arg7[%c0_5, %c0_6, %12], %15 {strides = array<i32>} : memref<2x32x256xf32, #tpu.memory_space<vmem>>, vector<1x32x256xf32>,
      %c0_7 = arith.constant 0 : index
      %c0_8 = arith.constant 0 : index
      %16 = vector.load %arg2[%c0_7, %c0_8] : memref<32x256xbf16, #tpu.memory_space<vmem>>, vector<32x256xbf16>
      %cst = arith.constant dense<0.000000e+00> : vector<32x256xf32>
      %17 = tpu.matmul %16, %2, %cst {dimension_numbers = #tpu.dot_dimension_numbers<[1], [0], [0], [1], [0, 0, 1, 1], [], []>} : vector<32x256xbf16>, vector<256x256xbf16>, vector<32x256xf32> -> vector<32x256xf32>
      %cst_9 = arith.constant 5.000000e-01 : f32
      %18 = vector.broadcast %cst_9 : f32 to vector<32x256xf32>
      %19 = arith.mulf %18, %17 : vector<32x256xf32>
      %c1 = arith.constant 1 : index
      %c0_10 = arith.constant 0 : index
      %20 = arith.index_cast %1 : i32 to index
      %21 = vector.load %arg7[%c1, %c0_10, %20] : memref<2x32x256xf32, #tpu.memory_space<vmem>>, vector<1x32x256xf32>
      %22 = vector.shape_cast %21 : vector<1x32x256xf32> to vector<32x256xf32>
      %23 = vector.shape_cast %19 : vector<32x256xf32> to vector<1x32x256xf32>
      tpu.vector_store %arg7[%c1, %c0_10, %20], %23 {strides = array<i32>} : memref<2x32x256xf32, #tpu.memory_space<vmem>>, vector<1x32x256xf32>,
      %c0_11 = arith.constant 0 : index
      %c0_12 = arith.constant 0 : index
      %24 = vector.load %arg5[%c0_11, %c0_12] : memref<64x1xf32, #tpu.memory_space<vmem>>, vector<64x1xf32>
      %c0_13 = arith.constant 0 : index
      %c0_14 = arith.constant 0 : index
      %c0_15 = arith.constant 0 : index
      %25 = vector.load %arg4[%c0_13, %c0_14, %c0_15] : memref<4x64x32xbf16, #tpu.memory_space<vmem>>, vector<1x64x32xbf16>
      %26 = vector.shape_cast %25 : vector<1x64x32xbf16> to vector<64x32xbf16>
      %cst_16 = arith.constant dense<0.000000e+00> : vector<64x256xf32>
      %27 = tpu.matmul %26, %10, %cst_16 {dimension_numbers = #tpu.dot_dimension_numbers<[1], [0], [0], [1], [0, 0, 1, 1], [], []>} : vector<64x32xbf16>, vector<32x256xbf16>, vector<64x256xf32> -> vector<64x256xf32>
      %28 = vector.broadcast %24 : vector<64x1xf32> to vector<64x256xf32>
      %29 = arith.addf %28, %27 : vector<64x256xf32>
      %c1_17 = arith.constant 1 : index
      %c0_18 = arith.constant 0 : index
      %c0_19 = arith.constant 0 : index
      %30 = vector.load %arg4[%c1_17, %c0_18, %c0_19] : memref<4x64x32xbf16, #tpu.memory_space<vmem>>, vector<1x64x32xbf16>
      %31 = vector.shape_cast %30 : vector<1x64x32xbf16> to vector<64x32xbf16>
      %32 = arith.truncf %19 : vector<32x256xf32> to vector<32x256xbf16>
      %cst_20 = arith.constant dense<0.000000e+00> : vector<64x256xf32>
      %33 = tpu.matmul %31, %32, %cst_20 {dimension_numbers = #tpu.dot_dimension_numbers<[1], [0], [0], [1], [0, 0, 1, 1], [], []>} : vector<64x32xbf16>, vector<32x256xbf16>, vector<64x256xf32> -> vector<64x256xf32>
      %34 = arith.addf %29, %33 : vector<64x256xf32>
      %c0_21 = arith.constant 0 : index
      %35 = arith.index_cast %1 : i32 to index
      %36 = vector.load %arg6[%c0_21, %35] : memref<64x256xf32, #tpu.memory_space<vmem>>, vector<64x256xf32>
      tpu.vector_store %arg6[%c0_21, %35], %34 {strides = array<i32>} : memref<64x256xf32, #tpu.memory_space<vmem>>, vector<64x256xf32>,
    } else {
    }
    %c0_i32_2 = arith.constant 0 : i32
    %6 = arith.cmpi sgt, %arg0, %c0_i32_2 : i32
    %7 = arith.extui %6 : i1 to i32
    %c0_i32_3 = arith.constant 0 : i32
    %8 = arith.cmpi ne, %7, %c0_i32_3 : i32
    scf.if %8 {
      %c2_i32 = arith.constant 2 : i32
      %c0_i32_4 = arith.constant 0 : i32
      %9 = arith.cmpi eq, %c2_i32, %c0_i32_4 : i32
      %c1_i32 = arith.constant 1 : i32
      %10 = arith.select %9, %c1_i32, %c2_i32 : i32
      %11 = arith.remsi %arg0, %10 : i32
      %c0_i32_5 = arith.constant 0 : i32
      %12 = arith.cmpi ne, %11, %c0_i32_5 : i32
      %c0_i32_6 = arith.constant 0 : i32
      %13 = arith.cmpi slt, %11, %c0_i32_6 : i32
      %c0_i32_7 = arith.constant 0 : i32
      %14 = arith.cmpi slt, %10, %c0_i32_7 : i32
      %15 = arith.xori %13, %14 : i1
      %16 = arith.andi %15, %12 : i1
      %17 = arith.addi %11, %10 : i32
      %18 = arith.select %16, %17, %11 : i32
      %c1_i32_8 = arith.constant 1 : i32
      %19 = arith.addi %arg0, %c1_i32_8 : i32
      %c2_i32_9 = arith.constant 2 : i32
      %c0_i32_10 = arith.constant 0 : i32
      %20 = arith.cmpi eq, %c2_i32_9, %c0_i32_10 : i32
      %c1_i32_11 = arith.constant 1 : i32
      %21 = arith.select %20, %c1_i32_11, %c2_i32_9 : i32
      %22 = arith.remsi %19, %21 : i32
      %c0_i32_12 = arith.constant 0 : i32
      %23 = arith.cmpi ne, %22, %c0_i32_12 : i32
      %c0_i32_13 = arith.constant 0 : i32
      %24 = arith.cmpi slt, %22, %c0_i32_13 : i32
      %c0_i32_14 = arith.constant 0 : i32
      %25 = arith.cmpi slt, %21, %c0_i32_14 : i32
      %26 = arith.xori %24, %25 : i1
      %27 = arith.andi %26, %23 : i1
      %28 = arith.addi %22, %21 : i32
      %29 = arith.select %27, %28, %22 : i32
      %30 = arith.index_cast %18 : i32 to index
      %c0_15 = arith.constant 0 : index
      %c0_16 = arith.constant 0 : index
      %31 = vector.load %arg7[%30, %c0_15, %c0_16] : memref<2x32x256xf32, #tpu.memory_space<vmem>>, vector<1x32x256xf32>
      %32 = vector.shape_cast %31 : vector<1x32x256xf32> to vector<32x256xf32>
      %33 = arith.index_cast %29 : i32 to index
      %c0_17 = arith.constant 0 : index
      %34 = arith.index_cast %1 : i32 to index
      %35 = vector.load %arg7[%33, %c0_17, %34] : memref<2x32x256xf32, #tpu.memory_space<vmem>>, vector<1x32x256xf32>
      %36 = vector.shape_cast %35 : vector<1x32x256xf32> to vector<32x256xf32>
      %37 = arith.truncf %32 : vector<32x256xf32> to vector<32x256xbf16>
      %cst = arith.constant dense<0.000000e+00> : vector<32x256xf32>
      %38 = tpu.matmul %37, %2, %cst {dimension_numbers = #tpu.dot_dimension_numbers<[1], [0], [0], [1], [0, 0, 1, 1], [], []>} : vector<32x256xbf16>, vector<256x256xbf16>, vector<32x256xf32> -> vector<32x256xf32>
      %39 = arith.subf %38, %36 : vector<32x256xf32>
      %40 = arith.index_cast %29 : i32 to index
      %c0_18 = arith.constant 0 : index
      %41 = arith.index_cast %1 : i32 to index
      %42 = vector.load %arg7[%40, %c0_18, %41] : memref<2x32x256xf32, #tpu.memory_space<vmem>>, vector<1x32x256xf32>
      %43 = vector.shape_cast %42 : vector<1x32x256xf32> to vector<32x256xf32>
      %44 = vector.shape_cast %39 : vector<32x256xf32> to vector<1x32x256xf32>
      tpu.vector_store %arg7[%40, %c0_18, %41], %44 {strides = array<i32>} : memref<2x32x256xf32, #tpu.memory_space<vmem>>, vector<1x32x256xf32>,
      %c0_19 = arith.constant 0 : index
      %45 = arith.index_cast %1 : i32 to index
      %46 = vector.load %arg6[%c0_19, %45] : memref<64x256xf32, #tpu.memory_space<vmem>>, vector<64x256xf32>
      %c1_i32_20 = arith.constant 1 : i32
      %47 = arith.addi %arg0, %c1_i32_20 : i32
      %48 = arith.index_cast %47 : i32 to index
      %c0_21 = arith.constant 0 : index
      %c0_22 = arith.constant 0 : index
      %49 = vector.load %arg4[%48, %c0_21, %c0_22] : memref<4x64x32xbf16, #tpu.memory_space<vmem>>, vector<1x64x32xbf16>
      %50 = vector.shape_cast %49 : vector<1x64x32xbf16> to vector<64x32xbf16>
      %51 = arith.truncf %39 : vector<32x256xf32> to vector<32x256xbf16>
      %cst_23 = arith.constant dense<0.000000e+00> : vector<64x256xf32>
      %52 = tpu.matmul %50, %51, %cst_23 {dimension_numbers = #tpu.dot_dimension_numbers<[1], [0], [0], [1], [0, 0, 1, 1], [], []>} : vector<64x32xbf16>, vector<32x256xbf16>, vector<64x256xf32> -> vector<64x256xf32>
      %53 = arith.addf %46, %52 : vector<64x256xf32>
      %c0_24 = arith.constant 0 : index
      %54 = arith.index_cast %1 : i32 to index
      %55 = vector.load %arg6[%c0_24, %54] : memref<64x256xf32, #tpu.memory_space<vmem>>, vector<64x256xf32>
      tpu.vector_store %arg6[%c0_24, %54], %53 {strides = array<i32>} : memref<64x256xf32, #tpu.memory_space<vmem>>, vector<64x256xf32>,
    } else {
    }
    return
  }
  func.func @transform_0(%arg0: i32, %arg1: i32) -> (i32, i32) {
    %c0_i32 = arith.constant 0 : i32
    %c0_i32_0 = arith.constant 0 : i32
    %c0_i32_1 = arith.constant 0 : i32
    return %c0_i32, %c0_i32_0 : i32, i32
  }
  func.func @transform_1(%arg0: i32, %arg1: i32) -> (i32, i32) {
    %c0_i32 = arith.constant 0 : i32
    %c0_i32_0 = arith.constant 0 : i32
    return %c0_i32, %arg1 : i32, i32
  }
  func.func @transform_2(%arg0: i32, %arg1: i32) -> (i32, i32, i32) {
    %c0_i32 = arith.constant 0 : i32
    %c0_i32_0 = arith.constant 0 : i32
    %c0_i32_1 = arith.constant 0 : i32
    %c0_i32_2 = arith.constant 0 : i32
    return %c0_i32, %c0_i32_0, %c0_i32_1 : i32, i32, i32
  }
  func.func @transform_3(%arg0: i32, %arg1: i32) -> (i32, i32) {
    %c0_i32 = arith.constant 0 : i32
    %c0_i32_0 = arith.constant 0 : i32
    %c0_i32_1 = arith.constant 0 : i32
    return %c0_i32, %c0_i32_0 : i32, i32
  }
  func.func @transform_4(%arg0: i32, %arg1: i32) -> (i32, i32) {
    %c0_i32 = arith.constant 0 : i32
    %c0_i32_0 = arith.constant 0 : i32
    %c0_i32_1 = arith.constant 0 : i32
    return %c0_i32, %c0_i32_0 : i32, i32
  }
}

</mosaic_0001>

<llo_original>
// kernel: tpu_custom_call.1
$region0: #{tpu_custom_call.1}
  #allocation0 [shape = 'u32[]', space=smem, size = 0x4, offset = 0x4, fixed_abs, tag = 'smem constant byte address 0x4 - core index']
  #allocation1 [shape = 'u32[144,128]{1,0:T(1,128)}', space=vmem, size = 0x12000, scoped, tag = 'internal scratch']
  #allocation2 [shape = 'f32[2,32,256]{2,1,0:T(8,128)}', space=vmem, size = 0x10000, scoped, tag = 'scratch operand']
  %s0 = inlined_call_operand.hbm [shape: bf16[32,256], index: 0, kind: input, shape index: {}]
  %s1 = inlined_call_operand.vmem [shape: bf16[256,256], index: 1, kind: input, shape index: {}]
  %s2 = inlined_call_operand.vmem [shape: bf16[4,64,32], index: 2, kind: input, shape index: {}]
  %s3 = inlined_call_operand.vmem [shape: f32[64,1], index: 3, kind: input, shape index: {}]
  %s4 = inlined_call_operand.hbm [shape: f32[64,256], index: 4, kind: output, shape index: {}]
  %s5 = sld [smem:[#allocation0]]
  $region61: #{tpu_custom_call.1} parent=0
    _
  %s7 = ssub.s32 1, %s5
  %s8 = scalar_select 0, %s7, %s5
  $region1: #{tpu_custom_call.1} parent=0
    #allocation3 [shape = 'u8[16384]{0}', space=vmem, size = 0x4000, scoped, tag = 'input window, operand 0, single buffered']
    #allocation4 [shape = 's32[2]{0}', space=sflag, size = 0x8, scoped, tag = 'scoped memory for tpu_custom_call.1']
    #allocation5 [shape = 's32[2]{0}', space=sflag, size = 0x8, scoped, tag = 'scoped memory for tpu_custom_call.1']
    #allocation6 [shape = 'u8[65536]{0}', space=vmem, size = 0x10000, scoped, tag = 'output window, operand 0, single buffered']
    %9 = vsyncpa [#allocation4], 0
    %10 = vsyncpa [#allocation5], 0
    loop: start=0, step=1, limit=5
    $region2: #{tpu_custom_call.1} parent=1 // loop_pre_header
      _
    $region3: #{tpu_custom_call.1} parent=1 // loop_header
      %s12 = sphi 0, %s16
      %p13 = scmp.ge.s32.totalorder %s12, 5
      %s19 = sphi 0, %s31
      %s20 = sphi 0, %s27
      %s21 = sphi 0, %s19
      %s22 = sphi 0, %s20
      %s23 = sphi 0, %s21
      %s24 = sphi 0, %s22
      %s32 = sphi 0, %s32
      %s34 = sphi 0, %s32
      %s35 = sphi 0, %s34
      %s49 = sphi 0, %s35
      %s55 = sphi 0, %s57
      %s58 = sphi 0, %s55
      %s59 = sphi 0, %s58
      %s75 = sphi 0, %s59
      %s79 = sphi 0, %s79
      %s81 = sphi 0, %s79
      %s82 = sphi 0, %s81
      %s96 = sphi 0, %s82
      %s100 = sphi 0, %s100
      %s102 = sphi 0, %s100
      %s103 = sphi 0, %s102
      %s117 = sphi 0, %s103
      %s121 = sphi 0, %s121
      %s123 = sphi 0, %s121
      %s124 = sphi 0, %s123
      %s138 = sphi 0, %s124
    $region4: #{tpu_custom_call.1} parent=1 // loop_header_branch
      %15 = sbr.rel (%p13) target = $region8
    $region5: #{tpu_custom_call.1} parent=1 // loop_body
      %s17 = ssub.s32 %s12, 1
      %s18 = ssub.s32 %s12, 2
      %s25 = sadd.s32 1, %s20
      %p26 = scmp.ge.s32.totalorder %s25, 1
      %s27 = scalar_select %p26, 0, %s25
      %s28 = sadd.s32 1, %s19
      %s29 = scalar_select %p26, %s28, %s19
      %p30 = scmp.ge.s32.totalorder %s29, 3
      %s31 = scalar_select %p30, 0, %s29
      %s33 = sadd.s32 %s32, 1
      %p36 = scmp.eq.s32.totalorder %s12, 2
      %p37 = scmp.ne.s32.totalorder %s32, %s34
      %p38 = scmp.eq.s32.totalorder %s12, 0
      %p39 = por %p37, %p38
      %p40 = scmp.ne.s32.totalorder %s32, %s34
      %p41 = scmp.eq.s32.totalorder %s17, 2
      %p42 = por %p40, %p41
      %p43 = scmp.ne.s32.totalorder %s34, %s35
      %p44 = scmp.eq.s32.totalorder %s17, 0
      %p45 = por %p43, %p44
      %p46 = scmp.ne.s32.totalorder %s34, %s35
      %p47 = scmp.eq.s32.totalorder %s18, 2
      %p48 = por %p46, %p47
      %p50 = scmp.ne.s32.totalorder %s35, %s49
      %p51 = scmp.eq.s32.totalorder %s18, 0
      %p52 = por %p50, %p51
      %s53 = ssub.s32 %s20, %s27
      %p54 = scmp.eq.s32.totalorder %s53, 0
      %s56 = sadd.s32 %s55, 1
      %s57 = scalar_select %p54, %s55, %s56
      %p60 = pneg %p54
      %p61 = scmp.eq.s32.totalorder %s12, 2
      %p62 = por %p60, %p61
      %p63 = scmp.ne.s32.totalorder %s55, %s58
      %p64 = scmp.eq.s32.totalorder %s12, 0
      %p65 = por %p63, %p64
      %p66 = scmp.ne.s32.totalorder %s55, %s58
      %p67 = scmp.eq.s32.totalorder %s17, 2
      %p68 = por %p66, %p67
      %p69 = scmp.ne.s32.totalorder %s58, %s59
      %p70 = scmp.eq.s32.totalorder %s17, 0
      %p71 = por %p69, %p70
      %p72 = scmp.ne.s32.totalorder %s58, %s59
      %p73 = scmp.eq.s32.totalorder %s18, 2
      %p74 = por %p72, %p73
      %p76 = scmp.ne.s32.totalorder %s59, %s75
      %p77 = scmp.eq.s32.totalorder %s18, 0
      %p78 = por %p76, %p77
      %s80 = sadd.s32 %s79, 1
      %p83 = scmp.eq.s32.totalorder %s12, 2
      %p84 = scmp.ne.s32.totalorder %s79, %s81
      %p85 = scmp.eq.s32.totalorder %s12, 0
      %p86 = por %p84, %p85
      %p87 = scmp.ne.s32.totalorder %s79, %s81
      %p88 = scmp.eq.s32.totalorder %s17, 2
      %p89 = por %p87, %p88
      %p90 = scmp.ne.s32.totalorder %s81, %s82
      %p91 = scmp.eq.s32.totalorder %s17, 0
      %p92 = por %p90, %p91
      %p93 = scmp.ne.s32.totalorder %s81, %s82
      %p94 = scmp.eq.s32.totalorder %s18, 2
      %p95 = por %p93, %p94
      %p97 = scmp.ne.s32.totalorder %s82, %s96
      %p98 = scmp.eq.s32.totalorder %s18, 0
      %p99 = por %p97, %p98
      %s101 = sadd.s32 %s100, 1
      %p104 = scmp.eq.s32.totalorder %s12, 2
      %p105 = scmp.ne.s32.totalorder %s100, %s102
      %p106 = scmp.eq.s32.totalorder %s12, 0
      %p107 = por %p105, %p106
      %p108 = scmp.ne.s32.totalorder %s100, %s102
      %p109 = scmp.eq.s32.totalorder %s17, 2
      %p110 = por %p108, %p109
      %p111 = scmp.ne.s32.totalorder %s102, %s103
      %p112 = scmp.eq.s32.totalorder %s17, 0
      %p113 = por %p111, %p112
      %p114 = scmp.ne.s32.totalorder %s102, %s103
      %p115 = scmp.eq.s32.totalorder %s18, 2
      %p116 = por %p114, %p115
      %p118 = scmp.ne.s32.totalorder %s103, %s117
      %p119 = scmp.eq.s32.totalorder %s18, 0
      %p120 = por %p118, %p119
      %s122 = sadd.s32 %s121, 1
      %p125 = scmp.eq.s32.totalorder %s12, 2
      %p126 = scmp.ne.s32.totalorder %s121, %s123
      %p127 = scmp.eq.s32.totalorder %s12, 0
      %p128 = por %p126, %p127
      %p129 = scmp.ne.s32.totalorder %s121, %s123
      %p130 = scmp.eq.s32.totalorder %s17, 2
      %p131 = por %p129, %p130
      %p132 = scmp.ne.s32.totalorder %s123, %s124
      %p133 = scmp.eq.s32.totalorder %s17, 0
      %p134 = por %p132, %p133
      %p135 = scmp.ne.s32.totalorder %s123, %s124
      %p136 = scmp.eq.s32.totalorder %s18, 2
      %p137 = por %p135, %p136
      %p139 = scmp.ne.s32.totalorder %s124, %s138
      %p140 = scmp.eq.s32.totalorder %s18, 0
      %p141 = por %p139, %p140
      %p142 = scmp.le.s32.totalorder 1, %s12
      %p143 = scmp.lt.s32.totalorder %s12, 4
      %p144 = pnand %p142, %p143
      %p145 = pneg %p144
      // Predicated region
      $region9: #{tpu_custom_call.1} parent=5 // pred_check
        _
      $region10: #{tpu_custom_call.1} parent=5 // pred_check_branch
        %147 = sbr.rel (%p144) target = $region12
      $region11: #{tpu_custom_call.1} parent=5 // pred_region
        %s148 = ssub.s32 %s12, 1
        // Predicated region
        $region13: #{tpu_custom_call.1} parent=11 // pred_check
          %p149 = pneg %p45
        $region14: #{tpu_custom_call.1} parent=11 // pred_check_branch
          %151 = sbr.rel (%p149) target = $region16
        $region15: #{tpu_custom_call.1} parent=11 // pred_region
          %s153 = ssub.s32 512, 512
          %154 = vsyncadd [#allocation4], %s153
          %s155 = sshll.u32 [#allocation3], 4
          %s156 = int_to_ptr.vmem [resolvable:$true] %s155
          %161 = dma.hbm_to_vmem [thread:$0]  %s0, 512, %s156, [#allocation4], 128, 128, 8
        $region16: #{tpu_custom_call.1} parent=11 // pred_fallthru
          _
        // Predicated region
        $region17: #{tpu_custom_call.1} parent=11 // pred_check
          %p162 = pneg %p71
        $region18: #{tpu_custom_call.1} parent=11 // pred_check_branch
          %164 = sbr.rel (%p162) target = $region20
        $region19: #{tpu_custom_call.1} parent=11 // pred_region
          %s165 = smul.u32 2, %s22
          %p166 = scmp.lt.s32.totalorder %s165, 1
          %s167 = scalar_select %p166, %s165, 1
          %s168 = smul.addr %s167, 4
          %s169 = scalar_lea.vmem %s1, %s168
          %s170 = smul.u32 2, %s22
        $region20: #{tpu_custom_call.1} parent=11 // pred_fallthru
          _
        // Predicated region
        $region21: #{tpu_custom_call.1} parent=11 // pred_check
          %p171 = pneg %p92
        $region22: #{tpu_custom_call.1} parent=11 // pred_check_branch
          %173 = sbr.rel (%p171) target = $region24
        $region23: #{tpu_custom_call.1} parent=11 // pred_region
          _
        $region24: #{tpu_custom_call.1} parent=11 // pred_fallthru
          _
        // Predicated region
        $region25: #{tpu_custom_call.1} parent=11 // pred_check
          %p174 = pneg %p113
        $region26: #{tpu_custom_call.1} parent=11 // pred_check_branch
          %176 = sbr.rel (%p174) target = $region28
        $region27: #{tpu_custom_call.1} parent=11 // pred_region
          _
        $region28: #{tpu_custom_call.1} parent=11 // pred_fallthru
          _
      $region12: #{tpu_custom_call.1} parent=5 // pred_fallthru
        _
      %p177 = scmp.lt.s32.totalorder %s12, 3
      // Predicated region
      $region29: #{tpu_custom_call.1} parent=5 // pred_check
        %p178 = pneg %p177
      $region30: #{tpu_custom_call.1} parent=5 // pred_check_branch
        %180 = sbr.rel (%p178) target = $region32
      $region31: #{tpu_custom_call.1} parent=5 // pred_region
        _
      $region32: #{tpu_custom_call.1} parent=5 // pred_fallthru
        _
      %p181 = scmp.le.s32.totalorder 1, %s12
      %p182 = scmp.lt.s32.totalorder %s12, 4
      %p183 = pnand %p181, %p182
      %p184 = pneg %p183
      // Predicated region
      $region33: #{tpu_custom_call.1} parent=5 // pred_check
        _
      $region34: #{tpu_custom_call.1} parent=5 // pred_check_branch
        %186 = sbr.rel (%p183) target = $region36
      $region35: #{tpu_custom_call.1} parent=5 // pred_region
        %s187 = ssub.s32 %s12, 1
        // Predicated region
        $region37: #{tpu_custom_call.1} parent=35 // pred_check
          %p188 = pneg %p45
        $region38: #{tpu_custom_call.1} parent=35 // pred_check_branch
          %190 = sbr.rel (%p188) target = $region40
        $region39: #{tpu_custom_call.1} parent=35 // pred_region
          %191 = dma.done [#allocation4], 512
        $region40: #{tpu_custom_call.1} parent=35 // pred_fallthru
          _
        %p192 = pneg %p45
        %p193 = pneg %p42
        %s194 = smul.u32 2, %s22
        %p195 = scmp.lt.s32.totalorder %s194, 1
        %s196 = scalar_select %p195, %s194, 1
        %s197 = smul.addr %s196, 4
        %s198 = scalar_lea.vmem %s1, %s197
        %p199 = pneg %p71
        %p200 = pneg %p68
        %p201 = pneg %p92
        %p202 = pneg %p89
        %p203 = pneg %p113
        %p204 = pneg %p110
        %p205 = pneg %p134
        %p206 = pneg %p131
        %s207 = smul.u32 2, %s22
        %p208 = scmp.lt.s32.totalorder %s207, 1
        %s209 = scalar_select %p208, %s207, 1
        %s210 = smul.addr %s209, 4
        %s211 = scalar_lea.vmem %s1, %s210
        %s212 = smul.u32 2, %s22
        %s214 = smul.u32 %s22, 256
        %v215 = vld [vmem:[%s211] sm:$0xff]
        %v216 = vld [vmem:[%s211 + $0x8] sm:$0xff]
        %v217 = vld [vmem:[%s211 + $0x10] sm:$0xff]
        %v218 = vld [vmem:[%s211 + $0x18] sm:$0xff]
        %v219 = vld [vmem:[%s211 + $0x20] sm:$0xff]
        %v220 = vld [vmem:[%s211 + $0x28] sm:$0xff]
        %v221 = vld [vmem:[%s211 + $0x30] sm:$0xff]
        %v222 = vld [vmem:[%s211 + $0x38] sm:$0xff]
        %v223 = vld [vmem:[%s211 + $0x40] sm:$0xff]
        %v224 = vld [vmem:[%s211 + $0x48] sm:$0xff]
        %v225 = vld [vmem:[%s211 + $0x50] sm:$0xff]
        %v226 = vld [vmem:[%s211 + $0x58] sm:$0xff]
        %v227 = vld [vmem:[%s211 + $0x60] sm:$0xff]
        %v228 = vld [vmem:[%s211 + $0x68] sm:$0xff]
        %v229 = vld [vmem:[%s211 + $0x70] sm:$0xff]
        %v230 = vld [vmem:[%s211 + $0x78] sm:$0xff]
        %v231 = vld [vmem:[%s211 + $0x80] sm:$0xff]
        %v232 = vld [vmem:[%s211 + $0x88] sm:$0xff]
        %v233 = vld [vmem:[%s211 + $0x90] sm:$0xff]
        %v234 = vld [vmem:[%s211 + $0x98] sm:$0xff]
        %v235 = vld [vmem:[%s211 + $0xa0] sm:$0xff]
        %v236 = vld [vmem:[%s211 + $0xa8] sm:$0xff]
        %v237 = vld [vmem:[%s211 + $0xb0] sm:$0xff]
        %v238 = vld [vmem:[%s211 + $0xb8] sm:$0xff]
        %v239 = vld [vmem:[%s211 + $0xc0] sm:$0xff]
        %v240 = vld [vmem:[%s211 + $0xc8] sm:$0xff]
        %v241 = vld [vmem:[%s211 + $0xd0] sm:$0xff]
        %v242 = vld [vmem:[%s211 + $0xd8] sm:$0xff]
        %v243 = vld [vmem:[%s211 + $0xe0] sm:$0xff]
        %v244 = vld [vmem:[%s211 + $0xe8] sm:$0xff]
        %v245 = vld [vmem:[%s211 + $0xf0] sm:$0xff]
        %v246 = vld [vmem:[%s211 + $0xf8] sm:$0xff]
        %p247 = scmp.eq.s32.totalorder %s21, 0
        // Predicated region
        $region41: #{tpu_custom_call.1} parent=35 // pred_check
          %p248 = pneg %p247
        $region42: #{tpu_custom_call.1} parent=35 // pred_check_branch
          %250 = sbr.rel (%p248) target = $region44
        $region43: #{tpu_custom_call.1} parent=35 // pred_region
          %s251 = sshra.s32 %s214, 7
          %s252 = sand.u32 %s214, 127
          %s253 = smul.addr %s251, 4
          %s254 = scalar_lea.vmem [#allocation3], %s253
          %v255 = vld [vmem:[%s254] sm:$0xff]
          %v256 = vld [vmem:[%s254 + $0x8] sm:$0xff]
          %v257 = vld [vmem:[%s254 + $0x10] sm:$0xff]
          %v258 = vld [vmem:[%s254 + $0x18] sm:$0xff]
          %v259 = vunpack.c.l.bf16 %v255
          %v260 = vunpack.c.h.bf16 %v255
          %v261 = vunpack.c.l.bf16 %v256
          %v262 = vunpack.c.h.bf16 %v256
          %v263 = vunpack.c.l.bf16 %v257
          %v264 = vunpack.c.h.bf16 %v257
          %v265 = vunpack.c.l.bf16 %v258
          %v266 = vunpack.c.h.bf16 %v258
          %s267 = smul.addr %s251, 8
          %s268 = scalar_lea.vmem [#allocation2], %s267
          %269 = vst [vmem:[%s268] sm:$0xff] %v259
          %270 = vst [vmem:[%s268 + $0x8] sm:$0xff] %v260
          %271 = vst [vmem:[%s268 + $0x10] sm:$0xff] %v261
          %272 = vst [vmem:[%s268 + $0x18] sm:$0xff] %v262
          %273 = vst [vmem:[%s268 + $0x20] sm:$0xff] %v263
          %274 = vst [vmem:[%s268 + $0x28] sm:$0xff] %v264
          %275 = vst [vmem:[%s268 + $0x30] sm:$0xff] %v265
          %276 = vst [vmem:[%s268 + $0x38] sm:$0xff] %v266
          %v277 = vld [vmem:[#allocation3] sm:$0xff]
          %v278 = vld [vmem:[#allocation3 + $0x8] sm:$0xff]
          %v279 = vld [vmem:[#allocation3 + $0x10] sm:$0xff]
          %v280 = vld [vmem:[#allocation3 + $0x18] sm:$0xff]
          %v285 = vunpack.c.l.b16 %v277
          %v286 = vunpack.c.h.b16 %v277
          %v287 = vunpack.c.l.b16 %v278
          %v288 = vunpack.c.h.b16 %v278
          %v289 = vunpack.c.l.b16 %v279
          %v290 = vunpack.c.h.b16 %v279
          %v291 = vunpack.c.l.b16 %v280
          %v292 = vunpack.c.h.b16 %v280
          %v293 = vpack.c.b16 %v287, %v285
          %v294 = vpack.c.b16 %v288, %v286
          %v295 = vpack.c.b16 %v291, %v289
          %v296 = vpack.c.b16 %v292, %v290
          %v333 = vunpack.c.l.b16 %v215
          %v334 = vunpack.c.h.b16 %v215
          %v335 = vunpack.c.l.b16 %v216
          %v336 = vunpack.c.h.b16 %v216
          %v337 = vunpack.c.l.b16 %v217
          %v338 = vunpack.c.h.b16 %v217
          %v339 = vunpack.c.l.b16 %v218
          %v340 = vunpack.c.h.b16 %v218
          %v341 = vunpack.c.l.b16 %v219
          %v342 = vunpack.c.h.b16 %v219
          %v343 = vunpack.c.l.b16 %v220
          %v344 = vunpack.c.h.b16 %v220
          %v345 = vunpack.c.l.b16 %v221
          %v346 = vunpack.c.h.b16 %v221
          %v347 = vunpack.c.l.b16 %v222
          %v348 = vunpack.c.h.b16 %v222
          %v349 = vunpack.c.l.b16 %v223
          %v350 = vunpack.c.h.b16 %v223
          %v351 = vunpack.c.l.b16 %v224
          %v352 = vunpack.c.h.b16 %v224
          %v353 = vunpack.c.l.b16 %v225
          %v354 = vunpack.c.h.b16 %v225
          %v355 = vunpack.c.l.b16 %v226
          %v356 = vunpack.c.h.b16 %v226
          %v357 = vunpack.c.l.b16 %v227
          %v358 = vunpack.c.h.b16 %v227
          %v359 = vunpack.c.l.b16 %v228
          %v360 = vunpack.c.h.b16 %v228
          %v361 = vunpack.c.l.b16 %v229
          %v362 = vunpack.c.h.b16 %v229
          %v363 = vunpack.c.l.b16 %v230
          %v364 = vunpack.c.h.b16 %v230
          %v365 = vunpack.c.l.b16 %v231
          %v366 = vunpack.c.h.b16 %v231
          %v367 = vunpack.c.l.b16 %v232
          %v368 = vunpack.c.h.b16 %v232
          %v369 = vunpack.c.l.b16 %v233
          %v370 = vunpack.c.h.b16 %v233
          %v371 = vunpack.c.l.b16 %v234
          %v372 = vunpack.c.h.b16 %v234
          %v373 = vunpack.c.l.b16 %v235
          %v374 = vunpack.c.h.b16 %v235
          %v375 = vunpack.c.l.b16 %v236
          %v376 = vunpack.c.h.b16 %v236
          %v377 = vunpack.c.l.b16 %v237
          %v378 = vunpack.c.h.b16 %v237
          %v379 = vunpack.c.l.b16 %v238
          %v380 = vunpack.c.h.b16 %v238
          %v381 = vunpack.c.l.b16 %v239
          %v382 = vunpack.c.h.b16 %v239
          %v383 = vunpack.c.l.b16 %v240
          %v384 = vunpack.c.h.b16 %v240
          %v385 = vunpack.c.l.b16 %v241
          %v386 = vunpack.c.h.b16 %v241
          %v387 = vunpack.c.l.b16 %v242
          %v388 = vunpack.c.h.b16 %v242
          %v389 = vunpack.c.l.b16 %v243
          %v390 = vunpack.c.h.b16 %v243
          %v391 = vunpack.c.l.b16 %v244
          %v392 = vunpack.c.h.b16 %v244
          %v393 = vunpack.c.l.b16 %v245
          %v394 = vunpack.c.h.b16 %v245
          %v395 = vunpack.c.l.b16 %v246
          %v396 = vunpack.c.h.b16 %v246
          %v397 = vpack.c.b16 %v335, %v333
          %v398 = vpack.c.b16 %v336, %v334
          %v399 = vpack.c.b16 %v339, %v337
          %v400 = vpack.c.b16 %v340, %v338
          %v401 = vpack.c.b16 %v343, %v341
          %v402 = vpack.c.b16 %v344, %v342
          %v403 = vpack.c.b16 %v347, %v345
          %v404 = vpack.c.b16 %v348, %v346
          %v405 = vpack.c.b16 %v351, %v349
          %v406 = vpack.c.b16 %v352, %v350
          %v407 = vpack.c.b16 %v355, %v353
          %v408 = vpack.c.b16 %v356, %v354
          %v409 = vpack.c.b16 %v359, %v357
          %v410 = vpack.c.b16 %v360, %v358
          %v411 = vpack.c.b16 %v363, %v361
          %v412 = vpack.c.b16 %v364, %v362
          %v413 = vpack.c.b16 %v367, %v365
          %v414 = vpack.c.b16 %v368, %v366
          %v415 = vpack.c.b16 %v371, %v369
          %v416 = vpack.c.b16 %v372, %v370
          %v417 = vpack.c.b16 %v375, %v373
          %v418 = vpack.c.b16 %v376, %v374
          %v419 = vpack.c.b16 %v379, %v377
          %v420 = vpack.c.b16 %v380, %v378
          %v421 = vpack.c.b16 %v383, %v381
          %v422 = vpack.c.b16 %v384, %v382
          %v423 = vpack.c.b16 %v387, %v385
          %v424 = vpack.c.b16 %v388, %v386
          %v425 = vpack.c.b16 %v391, %v389
          %v426 = vpack.c.b16 %v392, %v390
          %v427 = vpack.c.b16 %v395, %v393
          %v428 = vpack.c.b16 %v396, %v394
          %461 = vmatprep.subr.bf16.mxu0 %v412
          %462 = vmatpush1.bf16.msra.mxu0 %v411
          %463 = vmatprep.subr.bf16.mxu0 %v410
          %464 = vmatpush1.bf16.msra.mxu0 %v409
          %465 = vmatprep.subr.bf16.mxu0 %v408
          %466 = vmatpush1.bf16.msra.mxu0 %v407
          %467 = vmatprep.subr.bf16.mxu0 %v406
          %468 = vmatpush1.bf16.msra.mxu0 %v405
          %469 = vmatprep.subr.bf16.mxu0 %v404
          %470 = vmatpush1.bf16.msra.mxu0 %v403
          %471 = vmatprep.subr.bf16.mxu0 %v402
          %472 = vmatpush1.bf16.msra.mxu0 %v401
          %473 = vmatprep.subr.bf16.mxu0 %v400
          %474 = vmatpush1.bf16.msra.mxu0 %v399
          %475 = vmatprep.subr.bf16.mxu0 %v398
          %476 = vmatpush1.bf16.msra.mxu0 %v397
          %477 = vmatprep.subr.bf16.mxu0 %v428
          %478 = vmatpush2.bf16.msra.mxu0 %v427
          %479 = vmatprep.subr.bf16.mxu0 %v426
          %480 = vmatpush2.bf16.msra.mxu0 %v425
          %481 = vmatprep.subr.bf16.mxu0 %v424
          %482 = vmatpush2.bf16.msra.mxu0 %v423
          %483 = vmatprep.subr.bf16.mxu0 %v422
          %484 = vmatpush2.bf16.msra.mxu0 %v421
          %485 = vmatprep.subr.bf16.mxu0 %v420
          %486 = vmatpush2.bf16.msra.mxu0 %v419
          %487 = vmatprep.subr.bf16.mxu0 %v418
          %488 = vmatpush2.bf16.msra.mxu0 %v417
          %489 = vmatprep.subr.bf16.mxu0 %v416
          %490 = vmatpush2.bf16.msra.mxu0 %v415
          %491 = vmatprep.subr.bf16.mxu0 %v414
          %492 = vmatpush2.bf16.msra.mxu0 %v413
          %493 = vmatprep.mubr.bf16.mxu0 %v294
          %494 = vmatmul.mubr.bf16.gmra.mxu0 %v293
          %v495 = vpop.f32.mrf.mxu0
          %v496 = vadd.f32 0.0, %v495
          %v497 = vpop.f32.mrf.mxu0
          %v498 = vadd.f32 0.0, %v497
          %v499 = vpop.f32.mrf.mxu0
          %v500 = vadd.f32 0.0, %v499
          %v501 = vpop.f32.mrf.mxu0
          %v502 = vadd.f32 0.0, %v501
          %503 = vmatprep.mubr.bf16.mxu0 %v296
          %504 = vmatmul.mubr.bf16.gmra.mxu0 %v295
          %v505 = vpop.f32.mrf.mxu0
          %v506 = vadd.f32 0.0, %v505
          %v507 = vpop.f32.mrf.mxu0
          %v508 = vadd.f32 0.0, %v507
          %v509 = vpop.f32.mrf.mxu0
          %v510 = vadd.f32 0.0, %v509
          %v511 = vpop.f32.mrf.mxu0
          %v512 = vadd.f32 0.0, %v511
          %513 = vdwg.mxu0
          %v514 = vmul.f32 %v496, 0.5
          %v515 = vmul.f32 %v498, 0.5
          %v516 = vmul.f32 %v500, 0.5
          %v517 = vmul.f32 %v502, 0.5
          %v518 = vmul.f32 %v506, 0.5
          %v519 = vmul.f32 %v508, 0.5
          %v520 = vmul.f32 %v510, 0.5
          %v521 = vmul.f32 %v512, 0.5
          %s522 = sadd.s32 %s251, 8
          %s523 = smul.addr %s522, 8
          %s524 = scalar_lea.vmem [#allocation2], %s523
          %525 = vst [vmem:[%s524] sm:$0xff] %v514
          %526 = vst [vmem:[%s524 + $0x8] sm:$0xff] %v515
          %527 = vst [vmem:[%s524 + $0x10] sm:$0xff] %v516
          %528 = vst [vmem:[%s524 + $0x18] sm:$0xff] %v517
          %529 = vst [vmem:[%s524 + $0x20] sm:$0xff] %v518
          %530 = vst [vmem:[%s524 + $0x28] sm:$0xff] %v519
          %531 = vst [vmem:[%s524 + $0x30] sm:$0xff] %v520
          %532 = vst [vmem:[%s524 + $0x38] sm:$0xff] %v521
          %v533 = vld [vmem:[%s3] sm:$0xff]
          %v534 = vld [vmem:[%s3 + $0x8] sm:$0xff]
          %v535 = vld [vmem:[%s3 + $0x10] sm:$0xff]
          %v536 = vld [vmem:[%s3 + $0x18] sm:$0xff]
          %v537 = vld [vmem:[%s3 + $0x20] sm:$0xff]
          %v538 = vld [vmem:[%s3 + $0x28] sm:$0xff]
          %v539 = vld [vmem:[%s3 + $0x30] sm:$0xff]
          %v540 = vld [vmem:[%s3 + $0x38] sm:$0xff]
          %v541 = vld [vmem:[%s2] sm:$0xf]
          %v542 = vld [vmem:[%s2 + $0x4] sm:$0xf]
          %v543 = vld [vmem:[%s2 + $0x8] sm:$0xf]
          %v544 = vld [vmem:[%s2 + $0xc] sm:$0xf]
          %v545 = vld [vmem:[%s2 + $0x10] sm:$0xf]
          %v546 = vld [vmem:[%s2 + $0x14] sm:$0xf]
          %v547 = vld [vmem:[%s2 + $0x18] sm:$0xf]
          %v548 = vld [vmem:[%s2 + $0x1c] sm:$0xf]
          %v557 = vunpack.c.l.b16 %v541
          %v558 = vunpack.c.l.b16 %v542
          %v559 = vunpack.c.l.b16 %v543
          %v560 = vunpack.c.l.b16 %v544
          %v561 = vunpack.c.l.b16 %v545
          %v562 = vunpack.c.l.b16 %v546
          %v563 = vunpack.c.l.b16 %v547
          %v564 = vunpack.c.l.b16 %v548
          %v565 = vpack.c.b16 %v558, %v557
          %v566 = vpack.c.b16 %v560, %v559
          %v567 = vpack.c.b16 %v562, %v561
          %v568 = vpack.c.b16 %v564, %v563
          %v573 = vunpack.c.l.b16 %v255
          %v574 = vunpack.c.h.b16 %v255
          %v575 = vunpack.c.l.b16 %v256
          %v576 = vunpack.c.h.b16 %v256
          %v577 = vunpack.c.l.b16 %v257
          %v578 = vunpack.c.h.b16 %v257
          %v579 = vunpack.c.l.b16 %v258
          %v580 = vunpack.c.h.b16 %v258
          %v581 = vpack.c.b16 %v575, %v573
          %v582 = vpack.c.b16 %v576, %v574
          %v583 = vpack.c.b16 %v579, %v577
          %v584 = vpack.c.b16 %v580, %v578
          %vm589 = vcmask 261120
          %v591 = vsel %vm589, %v565, 0
          %v594 = vsel %vm589, %v566, 0
          %v597 = vsel %vm589, %v567, 0
          %v600 = vsel %vm589, %v568, 0
          %602 = vmatprep.subr.bf16.mxu0 0
          %603 = vmatpush1.bf16.msra.mxu0 0
          %604 = vmatprep.subr.bf16.mxu0 0
          %605 = vmatpush1.bf16.msra.mxu0 0
          %606 = vmatprep.subr.bf16.mxu0 0
          %607 = vmatpush1.bf16.msra.mxu0 0
          %608 = vmatprep.subr.bf16.mxu0 0
          %609 = vmatpush1.bf16.msra.mxu0 0
          %610 = vmatprep.subr.bf16.mxu0 0
          %611 = vmatpush1.bf16.msra.mxu0 0
          %612 = vmatprep.subr.bf16.mxu0 0
          %613 = vmatpush1.bf16.msra.mxu0 0
          %614 = vmatprep.subr.bf16.mxu0 %v584
          %615 = vmatpush1.bf16.msra.mxu0 %v583
          %616 = vmatprep.subr.bf16.mxu0 %v582
          %617 = vmatpush1.bf16.msra.mxu0 %v581
          %618 = vmatprep.subr.bf16.mxu0 0
          %619 = vmatpush2.bf16.msra.mxu0 0
          %620 = vmatprep.subr.bf16.mxu0 0
          %621 = vmatpush2.bf16.msra.mxu0 0
          %622 = vmatprep.subr.bf16.mxu0 0
          %623 = vmatpush2.bf16.msra.mxu0 0
          %624 = vmatprep.subr.bf16.mxu0 0
          %625 = vmatpush2.bf16.msra.mxu0 0
          %626 = vmatprep.subr.bf16.mxu0 0
          %627 = vmatpush2.bf16.msra.mxu0 0
          %628 = vmatprep.subr.bf16.mxu0 0
          %629 = vmatpush2.bf16.msra.mxu0 0
          %630 = vmatprep.subr.bf16.mxu0 0
          %631 = vmatpush2.bf16.msra.mxu0 0
          %632 = vmatprep.subr.bf16.mxu0 0
          %633 = vmatpush2.bf16.msra.mxu0 0
          %634 = vmatprep.mubr.bf16.mxu0 0
          %635 = vmatmul.mubr.bf16.gmra.mxu0 %v591
          %v636 = vpop.f32.mrf.mxu0
          %v637 = vadd.f32 0.0, %v636
          %v638 = vpop.f32.mrf.mxu0
          %v639 = vadd.f32 0.0, %v638
          %v640 = vpop.f32.mrf.mxu0
          %v641 = vadd.f32 0.0, %v640
          %v642 = vpop.f32.mrf.mxu0
          %v643 = vadd.f32 0.0, %v642
          %644 = vmatprep.mubr.bf16.mxu0 0
          %645 = vmatmul.mubr.bf16.gmra.mxu0 %v594
          %v646 = vpop.f32.mrf.mxu0
          %v647 = vadd.f32 0.0, %v646
          %v648 = vpop.f32.mrf.mxu0
          %v649 = vadd.f32 0.0, %v648
          %v650 = vpop.f32.mrf.mxu0
          %v651 = vadd.f32 0.0, %v650
          %v652 = vpop.f32.mrf.mxu0
          %v653 = vadd.f32 0.0, %v652
          %654 = vmatprep.mubr.bf16.mxu0 0
          %655 = vmatmul.mubr.bf16.gmra.mxu0 %v597
          %v656 = vpop.f32.mrf.mxu0
          %v657 = vadd.f32 0.0, %v656
          %v658 = vpop.f32.mrf.mxu0
          %v659 = vadd.f32 0.0, %v658
          %v660 = vpop.f32.mrf.mxu0
          %v661 = vadd.f32 0.0, %v660
          %v662 = vpop.f32.mrf.mxu0
          %v663 = vadd.f32 0.0, %v662
          %664 = vmatprep.mubr.bf16.mxu0 0
          %665 = vmatmul.mubr.bf16.gmra.mxu0 %v600
          %v666 = vpop.f32.mrf.mxu0
          %v667 = vadd.f32 0.0, %v666
          %v668 = vpop.f32.mrf.mxu0
          %v669 = vadd.f32 0.0, %v668
          %v670 = vpop.f32.mrf.mxu0
          %v671 = vadd.f32 0.0, %v670
          %v672 = vpop.f32.mrf.mxu0
          %v673 = vadd.f32 0.0, %v672
          %674 = vdwg.mxu0
          %676 = vset.pattern.permute.xlu0 0
          %677 = vperm.xlu0 %676, %v533
          %v678 = vpop.permute.xlu0 %677
          %681 = vset.pattern.permute.xlu0 0
          %682 = vperm.xlu0 %681, %v534
          %v683 = vpop.permute.xlu0 %682
          %686 = vset.pattern.permute.xlu0 0
          %687 = vperm.xlu0 %686, %v535
          %v688 = vpop.permute.xlu0 %687
          %691 = vset.pattern.permute.xlu0 0
          %692 = vperm.xlu0 %691, %v536
          %v693 = vpop.permute.xlu0 %692
          %696 = vset.pattern.permute.xlu0 0
          %697 = vperm.xlu0 %696, %v537
          %v698 = vpop.permute.xlu0 %697
          %701 = vset.pattern.permute.xlu0 0
          %702 = vperm.xlu0 %701, %v538
          %v703 = vpop.permute.xlu0 %702
          %706 = vset.pattern.permute.xlu0 0
          %707 = vperm.xlu0 %706, %v539
          %v708 = vpop.permute.xlu0 %707
          %711 = vset.pattern.permute.xlu0 0
          %712 = vperm.xlu0 %711, %v540
          %v713 = vpop.permute.xlu0 %712
          %v715 = vadd.f32 %v678, %v637
          %v716 = vadd.f32 %v678, %v639
          %v717 = vadd.f32 %v683, %v641
          %v718 = vadd.f32 %v683, %v643
          %v719 = vadd.f32 %v688, %v647
          %v720 = vadd.f32 %v688, %v649
          %v721 = vadd.f32 %v693, %v651
          %v722 = vadd.f32 %v693, %v653
          %v723 = vadd.f32 %v698, %v657
          %v724 = vadd.f32 %v698, %v659
          %v725 = vadd.f32 %v703, %v661
          %v726 = vadd.f32 %v703, %v663
          %v727 = vadd.f32 %v708, %v667
          %v728 = vadd.f32 %v708, %v669
          %v729 = vadd.f32 %v713, %v671
          %v730 = vadd.f32 %v713, %v673
          %s731 = scalar_lea.vmem %s2, 32
          %v732 = vld [vmem:[%s731] sm:$0xf]
          %v733 = vld [vmem:[%s731 + $0x4] sm:$0xf]
          %v734 = vld [vmem:[%s731 + $0x8] sm:$0xf]
          %v735 = vld [vmem:[%s731 + $0xc] sm:$0xf]
          %v736 = vld [vmem:[%s731 + $0x10] sm:$0xf]
          %v737 = vld [vmem:[%s731 + $0x14] sm:$0xf]
          %v738 = vld [vmem:[%s731 + $0x18] sm:$0xf]
          %v739 = vld [vmem:[%s731 + $0x1c] sm:$0xf]
          %v740 = vpack.c.bf16 %v516, %v514
          %v741 = vpack.c.bf16 %v517, %v515
          %v742 = vpack.c.bf16 %v520, %v518
          %v743 = vpack.c.bf16 %v521, %v519
          %v752 = vunpack.c.l.b16 %v732
          %v753 = vunpack.c.l.b16 %v733
          %v754 = vunpack.c.l.b16 %v734
          %v755 = vunpack.c.l.b16 %v735
          %v756 = vunpack.c.l.b16 %v736
          %v757 = vunpack.c.l.b16 %v737
          %v758 = vunpack.c.l.b16 %v738
          %v759 = vunpack.c.l.b16 %v739
          %v760 = vpack.c.b16 %v753, %v752
          %v761 = vpack.c.b16 %v755, %v754
          %v762 = vpack.c.b16 %v757, %v756
          %v763 = vpack.c.b16 %v759, %v758
          %v765 = vsel %vm589, %v760, 0
          %v768 = vsel %vm589, %v761, 0
          %v771 = vsel %vm589, %v762, 0
          %v774 = vsel %vm589, %v763, 0
          %776 = vmatprep.subr.bf16.mxu0 0
          %777 = vmatpush1.bf16.msra.mxu0 0
          %778 = vmatprep.subr.bf16.mxu0 0
          %779 = vmatpush1.bf16.msra.mxu0 0
          %780 = vmatprep.subr.bf16.mxu0 0
          %781 = vmatpush1.bf16.msra.mxu0 0
          %782 = vmatprep.subr.bf16.mxu0 0
          %783 = vmatpush1.bf16.msra.mxu0 0
          %784 = vmatprep.subr.bf16.mxu0 0
          %785 = vmatpush1.bf16.msra.mxu0 0
          %786 = vmatprep.subr.bf16.mxu0 0
          %787 = vmatpush1.bf16.msra.mxu0 0
          %788 = vmatprep.subr.bf16.mxu0 %v743
          %789 = vmatpush1.bf16.msra.mxu0 %v742
          %790 = vmatprep.subr.bf16.mxu0 %v741
          %791 = vmatpush1.bf16.msra.mxu0 %v740
          %792 = vmatprep.subr.bf16.mxu0 0
          %793 = vmatpush2.bf16.msra.mxu0 0
          %794 = vmatprep.subr.bf16.mxu0 0
          %795 = vmatpush2.bf16.msra.mxu0 0
          %796 = vmatprep.subr.bf16.mxu0 0
          %797 = vmatpush2.bf16.msra.mxu0 0
          %798 = vmatprep.subr.bf16.mxu0 0
          %799 = vmatpush2.bf16.msra.mxu0 0
          %800 = vmatprep.subr.bf16.mxu0 0
          %801 = vmatpush2.bf16.msra.mxu0 0
          %802 = vmatprep.subr.bf16.mxu0 0
          %803 = vmatpush2.bf16.msra.mxu0 0
          %804 = vmatprep.subr.bf16.mxu0 0
          %805 = vmatpush2.bf16.msra.mxu0 0
          %806 = vmatprep.subr.bf16.mxu0 0
          %807 = vmatpush2.bf16.msra.mxu0 0
          %808 = vmatprep.mubr.bf16.mxu0 0
          %809 = vmatmul.mubr.bf16.gmra.mxu0 %v765
          %v810 = vpop.f32.mrf.mxu0
          %v811 = vadd.f32 0.0, %v810
          %v812 = vpop.f32.mrf.mxu0
          %v813 = vadd.f32 0.0, %v812
          %v814 = vpop.f32.mrf.mxu0
          %v815 = vadd.f32 0.0, %v814
          %v816 = vpop.f32.mrf.mxu0
          %v817 = vadd.f32 0.0, %v816
          %818 = vmatprep.mubr.bf16.mxu0 0
          %819 = vmatmul.mubr.bf16.gmra.mxu0 %v768
          %v820 = vpop.f32.mrf.mxu0
          %v821 = vadd.f32 0.0, %v820
          %v822 = vpop.f32.mrf.mxu0
          %v823 = vadd.f32 0.0, %v822
          %v824 = vpop.f32.mrf.mxu0
          %v825 = vadd.f32 0.0, %v824
          %v826 = vpop.f32.mrf.mxu0
          %v827 = vadd.f32 0.0, %v826
          %828 = vmatprep.mubr.bf16.mxu0 0
          %829 = vmatmul.mubr.bf16.gmra.mxu0 %v771
          %v830 = vpop.f32.mrf.mxu0
          %v831 = vadd.f32 0.0, %v830
          %v832 = vpop.f32.mrf.mxu0
          %v833 = vadd.f32 0.0, %v832
          %v834 = vpop.f32.mrf.mxu0
          %v835 = vadd.f32 0.0, %v834
          %v836 = vpop.f32.mrf.mxu0
          %v837 = vadd.f32 0.0, %v836
          %838 = vmatprep.mubr.bf16.mxu0 0
          %839 = vmatmul.mubr.bf16.gmra.mxu0 %v774
          %v840 = vpop.f32.mrf.mxu0
          %v841 = vadd.f32 0.0, %v840
          %v842 = vpop.f32.mrf.mxu0
          %v843 = vadd.f32 0.0, %v842
          %v844 = vpop.f32.mrf.mxu0
          %v845 = vadd.f32 0.0, %v844
          %v846 = vpop.f32.mrf.mxu0
          %v847 = vadd.f32 0.0, %v846
          %848 = vdwg.mxu0
          %v849 = vadd.f32 %v715, %v811
          %v850 = vadd.f32 %v716, %v813
          %v851 = vadd.f32 %v717, %v815
          %v852 = vadd.f32 %v718, %v817
          %v853 = vadd.f32 %v719, %v821
          %v854 = vadd.f32 %v720, %v823
          %v855 = vadd.f32 %v721, %v825
          %v856 = vadd.f32 %v722, %v827
          %v857 = vadd.f32 %v723, %v831
          %v858 = vadd.f32 %v724, %v833
          %v859 = vadd.f32 %v725, %v835
          %v860 = vadd.f32 %v726, %v837
          %v861 = vadd.f32 %v727, %v841
          %v862 = vadd.f32 %v728, %v843
          %v863 = vadd.f32 %v729, %v845
          %v864 = vadd.f32 %v730, %v847
          %s865 = smul.addr %s251, 8
          %s866 = scalar_lea.vmem [#allocation6], %s865
          %867 = vst [vmem:[%s866] sm:$0xff] %v849
          %868 = vst [vmem:[%s866 + $0x8] sm:$0xff] %v850
          %869 = vst [vmem:[%s866 + $0x10] sm:$0xff] %v851
          %870 = vst [vmem:[%s866 + $0x18] sm:$0xff] %v852
          %871 = vst [vmem:[%s866 + $0x20] sm:$0xff] %v853
          %872 = vst [vmem:[%s866 + $0x28] sm:$0xff] %v854
          %873 = vst [vmem:[%s866 + $0x30] sm:$0xff] %v855
          %874 = vst [vmem:[%s866 + $0x38] sm:$0xff] %v856
          %875 = vst [vmem:[%s866 + $0x40] sm:$0xff] %v857
          %876 = vst [vmem:[%s866 + $0x48] sm:$0xff] %v858
          %877 = vst [vmem:[%s866 + $0x50] sm:$0xff] %v859
          %878 = vst [vmem:[%s866 + $0x58] sm:$0xff] %v860
          %879 = vst [vmem:[%s866 + $0x60] sm:$0xff] %v861
          %880 = vst [vmem:[%s866 + $0x68] sm:$0xff] %v862
          %881 = vst [vmem:[%s866 + $0x70] sm:$0xff] %v863
          %882 = vst [vmem:[%s866 + $0x78] sm:$0xff] %v864
        $region44: #{tpu_custom_call.1} parent=35 // pred_fallthru
          _
        %p883 = scmp.gt.s32.totalorder %s21, 0
        // Predicated region
        $region45: #{tpu_custom_call.1} parent=35 // pred_check
          %p884 = pneg %p883
        $region46: #{tpu_custom_call.1} parent=35 // pred_check_branch
          %886 = sbr.rel (%p884) target = $region48
        $region47: #{tpu_custom_call.1} parent=35 // pred_region
          %p887 = scmp.lt.s32.totalorder %s21, 0
          %s888 = ssub.s32 0, %s21
          %s889 = scalar_select %p887, %s888, %s21
          %s890 = sand.u32 %s889, 1
          %s891 = ssub.s32 0, %s890
          %s892 = scalar_select %p887, %s891, %s890
          %p893 = scmp.ne.s32.totalorder %s892, 0
          %p894 = scmp.lt.s32.totalorder %s892, 0
          %p895 = pnand %p894, %p893
          %p896 = pneg %p895
          %s897 = sadd.s32 %s892, 2
          %s898 = scalar_select %p896, %s897, %s892
          %s899 = sadd.s32 %s21, 1
          %p900 = scmp.lt.s32.totalorder %s899, 0
          %s901 = ssub.s32 0, %s899
          %s902 = scalar_select %p900, %s901, %s899
          %s903 = sand.u32 %s902, 1
          %s904 = ssub.s32 0, %s903
          %s905 = scalar_select %p900, %s904, %s903
          %p906 = scmp.ne.s32.totalorder %s905, 0
          %p907 = scmp.lt.s32.totalorder %s905, 0
          %p908 = pnand %p907, %p906
          %p909 = pneg %p908
          %s910 = sadd.s32 %s905, 2
          %s911 = scalar_select %p909, %s910, %s905
          %s912 = smul.u32 %s898, 8
          %s913 = smul.addr %s912, 8
          %s914 = scalar_lea.vmem [#allocation2], %s913
          %v915 = vld [vmem:[%s914] sm:$0xff]
          %v916 = vld [vmem:[%s914 + $0x8] sm:$0xff]
          %v917 = vld [vmem:[%s914 + $0x10] sm:$0xff]
          %v918 = vld [vmem:[%s914 + $0x18] sm:$0xff]
          %v919 = vld [vmem:[%s914 + $0x20] sm:$0xff]
          %v920 = vld [vmem:[%s914 + $0x28] sm:$0xff]
          %v921 = vld [vmem:[%s914 + $0x30] sm:$0xff]
          %v922 = vld [vmem:[%s914 + $0x38] sm:$0xff]
          %s923 = sshra.s32 %s214, 7
          %s924 = sand.u32 %s214, 127
          %s925 = smul.u32 %s911, 8
          %s926 = sadd.s32 %s923, %s925
          %s927 = smul.addr %s926, 8
          %s928 = scalar_lea.vmem [#allocation2], %s927
          %v929 = vld [vmem:[%s928] sm:$0xff]
          %v930 = vld [vmem:[%s928 + $0x8] sm:$0xff]
          %v931 = vld [vmem:[%s928 + $0x10] sm:$0xff]
          %v932 = vld [vmem:[%s928 + $0x18] sm:$0xff]
          %v933 = vld [vmem:[%s928 + $0x20] sm:$0xff]
          %v934 = vld [vmem:[%s928 + $0x28] sm:$0xff]
          %v935 = vld [vmem:[%s928 + $0x30] sm:$0xff]
          %v936 = vld [vmem:[%s928 + $0x38] sm:$0xff]
          %v937 = vpack.c.bf16 %v917, %v915
          %v938 = vpack.c.bf16 %v918, %v916
          %v939 = vpack.c.bf16 %v921, %v919
          %v940 = vpack.c.bf16 %v922, %v920
          %v973 = vunpack.c.l.b16 %v215
          %v974 = vunpack.c.h.b16 %v215
          %v975 = vunpack.c.l.b16 %v216
          %v976 = vunpack.c.h.b16 %v216
          %v977 = vunpack.c.l.b16 %v217
          %v978 = vunpack.c.h.b16 %v217
          %v979 = vunpack.c.l.b16 %v218
          %v980 = vunpack.c.h.b16 %v218
          %v981 = vunpack.c.l.b16 %v219
          %v982 = vunpack.c.h.b16 %v219
          %v983 = vunpack.c.l.b16 %v220
          %v984 = vunpack.c.h.b16 %v220
          %v985 = vunpack.c.l.b16 %v221
          %v986 = vunpack.c.h.b16 %v221
          %v987 = vunpack.c.l.b16 %v222
          %v988 = vunpack.c.h.b16 %v222
          %v989 = vunpack.c.l.b16 %v223
          %v990 = vunpack.c.h.b16 %v223
          %v991 = vunpack.c.l.b16 %v224
          %v992 = vunpack.c.h.b16 %v224
          %v993 = vunpack.c.l.b16 %v225
          %v994 = vunpack.c.h.b16 %v225
          %v995 = vunpack.c.l.b16 %v226
          %v996 = vunpack.c.h.b16 %v226
          %v997 = vunpack.c.l.b16 %v227
          %v998 = vunpack.c.h.b16 %v227
          %v999 = vunpack.c.l.b16 %v228
          %v1000 = vunpack.c.h.b16 %v228
          %v1001 = vunpack.c.l.b16 %v229
          %v1002 = vunpack.c.h.b16 %v229
          %v1003 = vunpack.c.l.b16 %v230
          %v1004 = vunpack.c.h.b16 %v230
          %v1005 = vunpack.c.l.b16 %v231
          %v1006 = vunpack.c.h.b16 %v231
          %v1007 = vunpack.c.l.b16 %v232
          %v1008 = vunpack.c.h.b16 %v232
          %v1009 = vunpack.c.l.b16 %v233
          %v1010 = vunpack.c.h.b16 %v233
          %v1011 = vunpack.c.l.b16 %v234
          %v1012 = vunpack.c.h.b16 %v234
          %v1013 = vunpack.c.l.b16 %v235
          %v1014 = vunpack.c.h.b16 %v235
          %v1015 = vunpack.c.l.b16 %v236
          %v1016 = vunpack.c.h.b16 %v236
          %v1017 = vunpack.c.l.b16 %v237
          %v1018 = vunpack.c.h.b16 %v237
          %v1019 = vunpack.c.l.b16 %v238
          %v1020 = vunpack.c.h.b16 %v238
          %v1021 = vunpack.c.l.b16 %v239
          %v1022 = vunpack.c.h.b16 %v239
          %v1023 = vunpack.c.l.b16 %v240
          %v1024 = vunpack.c.h.b16 %v240
          %v1025 = vunpack.c.l.b16 %v241
          %v1026 = vunpack.c.h.b16 %v241
          %v1027 = vunpack.c.l.b16 %v242
          %v1028 = vunpack.c.h.b16 %v242
          %v1029 = vunpack.c.l.b16 %v243
          %v1030 = vunpack.c.h.b16 %v243
          %v1031 = vunpack.c.l.b16 %v244
          %v1032 = vunpack.c.h.b16 %v244
          %v1033 = vunpack.c.l.b16 %v245
          %v1034 = vunpack.c.h.b16 %v245
          %v1035 = vunpack.c.l.b16 %v246
          %v1036 = vunpack.c.h.b16 %v246
          %v1037 = vpack.c.b16 %v975, %v973
          %v1038 = vpack.c.b16 %v976, %v974
          %v1039 = vpack.c.b16 %v979, %v977
          %v1040 = vpack.c.b16 %v980, %v978
          %v1041 = vpack.c.b16 %v983, %v981
          %v1042 = vpack.c.b16 %v984, %v982
          %v1043 = vpack.c.b16 %v987, %v985
          %v1044 = vpack.c.b16 %v988, %v986
          %v1045 = vpack.c.b16 %v991, %v989
          %v1046 = vpack.c.b16 %v992, %v990
          %v1047 = vpack.c.b16 %v995, %v993
          %v1048 = vpack.c.b16 %v996, %v994
          %v1049 = vpack.c.b16 %v999, %v997
          %v1050 = vpack.c.b16 %v1000, %v998
          %v1051 = vpack.c.b16 %v1003, %v1001
          %v1052 = vpack.c.b16 %v1004, %v1002
          %v1053 = vpack.c.b16 %v1007, %v1005
          %v1054 = vpack.c.b16 %v1008, %v1006
          %v1055 = vpack.c.b16 %v1011, %v1009
          %v1056 = vpack.c.b16 %v1012, %v1010
          %v1057 = vpack.c.b16 %v1015, %v1013
          %v1058 = vpack.c.b16 %v1016, %v1014
          %v1059 = vpack.c.b16 %v1019, %v1017
          %v1060 = vpack.c.b16 %v1020, %v1018
          %v1061 = vpack.c.b16 %v1023, %v1021
          %v1062 = vpack.c.b16 %v1024, %v1022
          %v1063 = vpack.c.b16 %v1027, %v1025
          %v1064 = vpack.c.b16 %v1028, %v1026
          %v1065 = vpack.c.b16 %v1031, %v1029
          %v1066 = vpack.c.b16 %v1032, %v1030
          %v1067 = vpack.c.b16 %v1035, %v1033
          %v1068 = vpack.c.b16 %v1036, %v1034
          %1101 = vmatprep.subr.bf16.mxu0 %v1052
          %1102 = vmatpush1.bf16.msra.mxu0 %v1051
          %1103 = vmatprep.subr.bf16.mxu0 %v1050
          %1104 = vmatpush1.bf16.msra.mxu0 %v1049
          %1105 = vmatprep.subr.bf16.mxu0 %v1048
          %1106 = vmatpush1.bf16.msra.mxu0 %v1047
          %1107 = vmatprep.subr.bf16.mxu0 %v1046
          %1108 = vmatpush1.bf16.msra.mxu0 %v1045
          %1109 = vmatprep.subr.bf16.mxu0 %v1044
          %1110 = vmatpush1.bf16.msra.mxu0 %v1043
          %1111 = vmatprep.subr.bf16.mxu0 %v1042
          %1112 = vmatpush1.bf16.msra.mxu0 %v1041
          %1113 = vmatprep.subr.bf16.mxu0 %v1040
          %1114 = vmatpush1.bf16.msra.mxu0 %v1039
          %1115 = vmatprep.subr.bf16.mxu0 %v1038
          %1116 = vmatpush1.bf16.msra.mxu0 %v1037
          %1117 = vmatprep.subr.bf16.mxu0 %v1068
          %1118 = vmatpush2.bf16.msra.mxu0 %v1067
          %1119 = vmatprep.subr.bf16.mxu0 %v1066
          %1120 = vmatpush2.bf16.msra.mxu0 %v1065
          %1121 = vmatprep.subr.bf16.mxu0 %v1064
          %1122 = vmatpush2.bf16.msra.mxu0 %v1063
          %1123 = vmatprep.subr.bf16.mxu0 %v1062
          %1124 = vmatpush2.bf16.msra.mxu0 %v1061
          %1125 = vmatprep.subr.bf16.mxu0 %v1060
          %1126 = vmatpush2.bf16.msra.mxu0 %v1059
          %1127 = vmatprep.subr.bf16.mxu0 %v1058
          %1128 = vmatpush2.bf16.msra.mxu0 %v1057
          %1129 = vmatprep.subr.bf16.mxu0 %v1056
          %1130 = vmatpush2.bf16.msra.mxu0 %v1055
          %1131 = vmatprep.subr.bf16.mxu0 %v1054
          %1132 = vmatpush2.bf16.msra.mxu0 %v1053
          %1133 = vmatprep.mubr.bf16.mxu0 %v938
          %1134 = vmatmul.mubr.bf16.gmra.mxu0 %v937
          %v1135 = vpop.f32.mrf.mxu0
          %v1136 = vadd.f32 0.0, %v1135
          %v1137 = vpop.f32.mrf.mxu0
          %v1138 = vadd.f32 0.0, %v1137
          %v1139 = vpop.f32.mrf.mxu0
          %v1140 = vadd.f32 0.0, %v1139
          %v1141 = vpop.f32.mrf.mxu0
          %v1142 = vadd.f32 0.0, %v1141
          %1143 = vmatprep.mubr.bf16.mxu0 %v940
          %1144 = vmatmul.mubr.bf16.gmra.mxu0 %v939
          %v1145 = vpop.f32.mrf.mxu0
          %v1146 = vadd.f32 0.0, %v1145
          %v1147 = vpop.f32.mrf.mxu0
          %v1148 = vadd.f32 0.0, %v1147
          %v1149 = vpop.f32.mrf.mxu0
          %v1150 = vadd.f32 0.0, %v1149
          %v1151 = vpop.f32.mrf.mxu0
          %v1152 = vadd.f32 0.0, %v1151
          %1153 = vdwg.mxu0
          %v1154 = vsub.f32 %v1136, %v929
          %v1155 = vsub.f32 %v1138, %v930
          %v1156 = vsub.f32 %v1140, %v931
          %v1157 = vsub.f32 %v1142, %v932
          %v1158 = vsub.f32 %v1146, %v933
          %v1159 = vsub.f32 %v1148, %v934
          %v1160 = vsub.f32 %v1150, %v935
          %v1161 = vsub.f32 %v1152, %v936
          %1162 = vst [vmem:[%s928] sm:$0xff] %v1154
          %1163 = vst [vmem:[%s928 + $0x8] sm:$0xff] %v1155
          %1164 = vst [vmem:[%s928 + $0x10] sm:$0xff] %v1156
          %1165 = vst [vmem:[%s928 + $0x18] sm:$0xff] %v1157
          %1166 = vst [vmem:[%s928 + $0x20] sm:$0xff] %v1158
          %1167 = vst [vmem:[%s928 + $0x28] sm:$0xff] %v1159
          %1168 = vst [vmem:[%s928 + $0x30] sm:$0xff] %v1160
          %1169 = vst [vmem:[%s928 + $0x38] sm:$0xff] %v1161
          %s1170 = smul.addr %s923, 8
          %s1171 = scalar_lea.vmem [#allocation6], %s1170
          %v1172 = vld [vmem:[%s1171] sm:$0xff]
          %v1173 = vld [vmem:[%s1171 + $0x8] sm:$0xff]
          %v1174 = vld [vmem:[%s1171 + $0x10] sm:$0xff]
          %v1175 = vld [vmem:[%s1171 + $0x18] sm:$0xff]
          %v1176 = vld [vmem:[%s1171 + $0x20] sm:$0xff]
          %v1177 = vld [vmem:[%s1171 + $0x28] sm:$0xff]
          %v1178 = vld [vmem:[%s1171 + $0x30] sm:$0xff]
          %v1179 = vld [vmem:[%s1171 + $0x38] sm:$0xff]
          %v1180 = vld [vmem:[%s1171 + $0x40] sm:$0xff]
          %v1181 = vld [vmem:[%s1171 + $0x48] sm:$0xff]
          %v1182 = vld [vmem:[%s1171 + $0x50] sm:$0xff]
          %v1183 = vld [vmem:[%s1171 + $0x58] sm:$0xff]
          %v1184 = vld [vmem:[%s1171 + $0x60] sm:$0xff]
          %v1185 = vld [vmem:[%s1171 + $0x68] sm:$0xff]
          %v1186 = vld [vmem:[%s1171 + $0x70] sm:$0xff]
          %v1187 = vld [vmem:[%s1171 + $0x78] sm:$0xff]
          %s1188 = smul.u32 %s899, 8
          %s1189 = smul.addr %s1188, 4
          %s1190 = scalar_lea.vmem %s2, %s1189
          %v1191 = vld [vmem:[%s1190] sm:$0xf]
          %v1192 = vld [vmem:[%s1190 + $0x4] sm:$0xf]
          %v1193 = vld [vmem:[%s1190 + $0x8] sm:$0xf]
          %v1194 = vld [vmem:[%s1190 + $0xc] sm:$0xf]
          %v1195 = vld [vmem:[%s1190 + $0x10] sm:$0xf]
          %v1196 = vld [vmem:[%s1190 + $0x14] sm:$0xf]
          %v1197 = vld [vmem:[%s1190 + $0x18] sm:$0xf]
          %v1198 = vld [vmem:[%s1190 + $0x1c] sm:$0xf]
          %v1199 = vpack.c.bf16 %v1156, %v1154
          %v1200 = vpack.c.bf16 %v1157, %v1155
          %v1201 = vpack.c.bf16 %v1160, %v1158
          %v1202 = vpack.c.bf16 %v1161, %v1159
          %v1211 = vunpack.c.l.b16 %v1191
          %v1212 = vunpack.c.l.b16 %v1192
          %v1213 = vunpack.c.l.b16 %v1193
          %v1214 = vunpack.c.l.b16 %v1194
          %v1215 = vunpack.c.l.b16 %v1195
          %v1216 = vunpack.c.l.b16 %v1196
          %v1217 = vunpack.c.l.b16 %v1197
          %v1218 = vunpack.c.l.b16 %v1198
          %v1219 = vpack.c.b16 %v1212, %v1211
          %v1220 = vpack.c.b16 %v1214, %v1213
          %v1221 = vpack.c.b16 %v1216, %v1215
          %v1222 = vpack.c.b16 %v1218, %v1217
          %vm1223 = vcmask 261120
          %v1225 = vsel %vm1223, %v1219, 0
          %v1228 = vsel %vm1223, %v1220, 0
          %v1231 = vsel %vm1223, %v1221, 0
          %v1234 = vsel %vm1223, %v1222, 0
          %1236 = vmatprep.subr.bf16.mxu0 0
          %1237 = vmatpush1.bf16.msra.mxu0 0
          %1238 = vmatprep.subr.bf16.mxu0 0
          %1239 = vmatpush1.bf16.msra.mxu0 0
          %1240 = vmatprep.subr.bf16.mxu0 0
          %1241 = vmatpush1.bf16.msra.mxu0 0
          %1242 = vmatprep.subr.bf16.mxu0 0
          %1243 = vmatpush1.bf16.msra.mxu0 0
          %1244 = vmatprep.subr.bf16.mxu0 0
          %1245 = vmatpush1.bf16.msra.mxu0 0
          %1246 = vmatprep.subr.bf16.mxu0 0
          %1247 = vmatpush1.bf16.msra.mxu0 0
          %1248 = vmatprep.subr.bf16.mxu0 %v1202
          %1249 = vmatpush1.bf16.msra.mxu0 %v1201
          %1250 = vmatprep.subr.bf16.mxu0 %v1200
          %1251 = vmatpush1.bf16.msra.mxu0 %v1199
          %1252 = vmatprep.subr.bf16.mxu0 0
          %1253 = vmatpush2.bf16.msra.mxu0 0
          %1254 = vmatprep.subr.bf16.mxu0 0
          %1255 = vmatpush2.bf16.msra.mxu0 0
          %1256 = vmatprep.subr.bf16.mxu0 0
          %1257 = vmatpush2.bf16.msra.mxu0 0
          %1258 = vmatprep.subr.bf16.mxu0 0
          %1259 = vmatpush2.bf16.msra.mxu0 0
          %1260 = vmatprep.subr.bf16.mxu0 0
          %1261 = vmatpush2.bf16.msra.mxu0 0
          %1262 = vmatprep.subr.bf16.mxu0 0
          %1263 = vmatpush2.bf16.msra.mxu0 0
          %1264 = vmatprep.subr.bf16.mxu0 0
          %1265 = vmatpush2.bf16.msra.mxu0 0
          %1266 = vmatprep.subr.bf16.mxu0 0
          %1267 = vmatpush2.bf16.msra.mxu0 0
          %1268 = vmatprep.mubr.bf16.mxu0 0
          %1269 = vmatmul.mubr.bf16.gmra.mxu0 %v1225
          %v1270 = vpop.f32.mrf.mxu0
          %v1271 = vadd.f32 0.0, %v1270
          %v1272 = vpop.f32.mrf.mxu0
          %v1273 = vadd.f32 0.0, %v1272
          %v1274 = vpop.f32.mrf.mxu0
          %v1275 = vadd.f32 0.0, %v1274
          %v1276 = vpop.f32.mrf.mxu0
          %v1277 = vadd.f32 0.0, %v1276
          %1278 = vmatprep.mubr.bf16.mxu0 0
          %1279 = vmatmul.mubr.bf16.gmra.mxu0 %v1228
          %v1280 = vpop.f32.mrf.mxu0
          %v1281 = vadd.f32 0.0, %v1280
          %v1282 = vpop.f32.mrf.mxu0
          %v1283 = vadd.f32 0.0, %v1282
          %v1284 = vpop.f32.mrf.mxu0
          %v1285 = vadd.f32 0.0, %v1284
          %v1286 = vpop.f32.mrf.mxu0
          %v1287 = vadd.f32 0.0, %v1286
          %1288 = vmatprep.mubr.bf16.mxu0 0
          %1289 = vmatmul.mubr.bf16.gmra.mxu0 %v1231
          %v1290 = vpop.f32.mrf.mxu0
          %v1291 = vadd.f32 0.0, %v1290
          %v1292 = vpop.f32.mrf.mxu0
          %v1293 = vadd.f32 0.0, %v1292
          %v1294 = vpop.f32.mrf.mxu0
          %v1295 = vadd.f32 0.0, %v1294
          %v1296 = vpop.f32.mrf.mxu0
          %v1297 = vadd.f32 0.0, %v1296
          %1298 = vmatprep.mubr.bf16.mxu0 0
          %1299 = vmatmul.mubr.bf16.gmra.mxu0 %v1234
          %v1300 = vpop.f32.mrf.mxu0
          %v1301 = vadd.f32 0.0, %v1300
          %v1302 = vpop.f32.mrf.mxu0
          %v1303 = vadd.f32 0.0, %v1302
          %v1304 = vpop.f32.mrf.mxu0
          %v1305 = vadd.f32 0.0, %v1304
          %v1306 = vpop.f32.mrf.mxu0
          %v1307 = vadd.f32 0.0, %v1306
          %1308 = vdwg.mxu0
          %v1309 = vadd.f32 %v1172, %v1271
          %v1310 = vadd.f32 %v1173, %v1273
          %v1311 = vadd.f32 %v1174, %v1275
          %v1312 = vadd.f32 %v1175, %v1277
          %v1313 = vadd.f32 %v1176, %v1281
          %v1314 = vadd.f32 %v1177, %v1283
          %v1315 = vadd.f32 %v1178, %v1285
          %v1316 = vadd.f32 %v1179, %v1287
          %v1317 = vadd.f32 %v1180, %v1291
          %v1318 = vadd.f32 %v1181, %v1293
          %v1319 = vadd.f32 %v1182, %v1295
          %v1320 = vadd.f32 %v1183, %v1297
          %v1321 = vadd.f32 %v1184, %v1301
          %v1322 = vadd.f32 %v1185, %v1303
          %v1323 = vadd.f32 %v1186, %v1305
          %v1324 = vadd.f32 %v1187, %v1307
          %1325 = vst [vmem:[%s1171] sm:$0xff] %v1309
          %1326 = vst [vmem:[%s1171 + $0x8] sm:$0xff] %v1310
          %1327 = vst [vmem:[%s1171 + $0x10] sm:$0xff] %v1311
          %1328 = vst [vmem:[%s1171 + $0x18] sm:$0xff] %v1312
          %1329 = vst [vmem:[%s1171 + $0x20] sm:$0xff] %v1313
          %1330 = vst [vmem:[%s1171 + $0x28] sm:$0xff] %v1314
          %1331 = vst [vmem:[%s1171 + $0x30] sm:$0xff] %v1315
          %1332 = vst [vmem:[%s1171 + $0x38] sm:$0xff] %v1316
          %1333 = vst [vmem:[%s1171 + $0x40] sm:$0xff] %v1317
          %1334 = vst [vmem:[%s1171 + $0x48] sm:$0xff] %v1318
          %1335 = vst [vmem:[%s1171 + $0x50] sm:$0xff] %v1319
          %1336 = vst [vmem:[%s1171 + $0x58] sm:$0xff] %v1320
          %1337 = vst [vmem:[%s1171 + $0x60] sm:$0xff] %v1321
          %1338 = vst [vmem:[%s1171 + $0x68] sm:$0xff] %v1322
          %1339 = vst [vmem:[%s1171 + $0x70] sm:$0xff] %v1323
          %1340 = vst [vmem:[%s1171 + $0x78] sm:$0xff] %v1324
        $region48: #{tpu_custom_call.1} parent=35 // pred_fallthru
          _
        // Predicated region
        $region49: #{tpu_custom_call.1} parent=35 // pred_check
          %p1341 = pneg %p131
        $region50: #{tpu_custom_call.1} parent=35 // pred_check_branch
          %1343 = sbr.rel (%p1341) target = $region52
        $region51: #{tpu_custom_call.1} parent=35 // pred_region
          %s1345 = ssub.s32 2048, 2048
          %1346 = vsyncadd [#allocation5], %s1345
          %s1347 = sshll.u32 [#allocation6], 4
          %s1348 = int_to_ptr.vmem [resolvable:$true] %s1347
          %1353 = dma.vmem_to_hbm [thread:$0]  %s1348, 2048, %s4, [#allocation5], 256, 256, 16
        $region52: #{tpu_custom_call.1} parent=35 // pred_fallthru
          _
        // Predicated region
        $region53: #{tpu_custom_call.1} parent=35 // pred_check
          %p1354 = pneg %p131
        $region54: #{tpu_custom_call.1} parent=35 // pred_check_branch
          %1356 = sbr.rel (%p1354) target = $region56
        $region55: #{tpu_custom_call.1} parent=35 // pred_region
          %1357 = dma.done [#allocation5], 2048
        $region56: #{tpu_custom_call.1} parent=35 // pred_fallthru
          _
      $region36: #{tpu_custom_call.1} parent=5 // pred_fallthru
        _
      %p1358 = scmp.le.s32.totalorder 2, %s12
      // Predicated region
      $region57: #{tpu_custom_call.1} parent=5 // pred_check
        %p1359 = pneg %p1358
      $region58: #{tpu_custom_call.1} parent=5 // pred_check_branch
        %1361 = sbr.rel (%p1359) target = $region60
      $region59: #{tpu_custom_call.1} parent=5 // pred_region
        %s1362 = ssub.s32 %s12, 2
      $region60: #{tpu_custom_call.1} parent=5 // pred_fallthru
        _
    $region6: #{tpu_custom_call.1} parent=1 // loop_footer
      %s16 = sadd.s32 1, %s12
    $region7: #{tpu_custom_call.1} parent=1 // loop_footer_branch
      %11 = sbr.rel target = $region3
    $region8: #{tpu_custom_call.1} parent=1 // loop_exit
      _
    %1363 = vsyncpa [#allocation4], 1
    %s1364 = scalar_lea.sflag [#allocation4], 1
    %1365 = vsyncpa %s1364, 1
    %1366 = vsyncpa [#allocation5], 1
    %s1367 = scalar_lea.sflag [#allocation5], 1
    %1368 = vsyncpa %s1367, 1

</llo_original>
